<compile_context>
chip_gen: v5e
topology: v5e:2x2
jax: 0.10.0
libtpu: 0.0.40
codegen_flags: <defaults>
</compile_context>

<pallas_src>
import functools
import math

import jax
import jax.numpy as jnp
from jax.experimental import pallas as pl
from jax.experimental.pallas import tpu as pltpu


# ---------------------------------------------------------------------------
# budget / tiling helpers
# ---------------------------------------------------------------------------

@functools.lru_cache(maxsize=1)
def _vmem_limit_bytes():
    """Generation-aware scoped-VMEM limit: ~75% of physical VMEM.

    ~96 MiB on v5e/v6e (128 MiB physical), ~48 MiB on v7x (64 MiB physical).
    """
    cap = 64 * 1024 * 1024
    try:
        info = pltpu.get_tpu_info()
        cap = int(getattr(info, "vmem_capacity_bytes", cap))
    except Exception:
        pass
    return max(32 * 1024 * 1024, (cap * 3) // 4)


def _min_sublane(dtype):
    # Sub-32-bit dtypes pack along sublanes: bf16 needs >=16, int8/fp8 >=32.
    return {1: 32, 2: 16}.get(jnp.dtype(dtype).itemsize, 8)


def _pick_tile(dim, candidates):
    """Largest candidate that evenly divides `dim`, else the full dim."""
    for c in candidates:
        if c <= dim and dim % c == 0:
            return c
    return dim


def _linear_tiles(M, K, N, dtype, n_out=1):
    itemsize = jnp.dtype(dtype).itemsize
    vmem = _vmem_limit_bytes()
    tm_cand = tuple(c for c in (1024, 512, 256, 128, 64, 32, 16, 8)
                    if c >= _min_sublane(dtype))
    ln_cand = (512, 256, 128)          # MXU-shaped lane-dim tiles
    tm = _pick_tile(M, tm_cand)
    tn = _pick_tile(N, ln_cand)
    tk = _pick_tile(K, ln_cand)

    def footprint(tm_):
        # double-buffered x / weights / outputs + f32 accumulators
        return (2 * itemsize * (tm_ * tk + n_out * tk * tn + n_out * tm_ * tn)
                + 4 * n_out * tm_ * tn)

    while footprint(tm) > vmem // 2:
        smaller = [c for c in tm_cand if c < tm and M % c == 0]
        if not smaller:
            break
        tm = smaller[0]
    return tm, tn, tk


def _attn_tiles(Sq, Sk, H, h, dtype):
    itemsize = jnp.dtype(dtype).itemsize
    vmem = _vmem_limit_bytes()
    cand = tuple(c for c in (256, 128, 64, 32, 16, 8) if c >= _min_sublane(dtype))
    tq_opts = [c for c in cand if Sq % c == 0] or [Sq]
    tk_opts = [c for c in cand if Sk % c == 0] or [Sk]

    def footprint(tq, tk):
        io = 2 * itemsize * (H * tq * h + 2 * H * tk * h + tq * H * h)
        sc = 4 * (2 * H * tq + H * tq * h)
        return io + sc

    for tq in tq_opts:
        for tk in tk_opts:
            if footprint(tq, tk) <= vmem // 2:
                return tq, tk
    return tq_opts[-1], tk_opts[-1]


# ---------------------------------------------------------------------------
# Tiled linear kernels (y = x @ W (+ b))
# ---------------------------------------------------------------------------

def _linear_kernel(x_ref, w_ref, o_ref, acc_ref):
    @pl.when(pl.program_id(2) == 0)
    def _():
        acc_ref[...] = jnp.zeros_like(acc_ref)

    acc_ref[...] += jnp.dot(x_ref[...], w_ref[...],
                            preferred_element_type=jnp.float32)

    @pl.when(pl.program_id(2) == pl.num_programs(2) - 1)
    def _():
        o_ref[...] = acc_ref[...].astype(o_ref.dtype)


def _linear_bias_kernel(x_ref, w_ref, b_ref, o_ref, acc_ref):
    @pl.when(pl.program_id(2) == 0)
    def _():
        acc_ref[...] = jnp.zeros_like(acc_ref)

    acc_ref[...] += jnp.dot(x_ref[...], w_ref[...],
                            preferred_element_type=jnp.float32)

    @pl.when(pl.program_id(2) == pl.num_programs(2) - 1)
    def _():
        o_ref[...] = (acc_ref[...] + b_ref[...]).astype(o_ref.dtype)


def linear_pallas(x, w, b=None):
    """y = x @ w (+ b).  x:(M,K), w:(K,N), b:(N,) or None."""
    M, K = x.shape
    N = w.shape[1]
    tm, tn, tk = _linear_tiles(M, K, N, x.dtype, n_out=1)
    grid = (M // tm, N // tn, K // tk)

    itemsize = jnp.dtype(x.dtype).itemsize
    cost = pl.CostEstimate(
        flops=2 * M * N * K,
        transcendentals=0,
        bytes_accessed=(M * K + K * N + M * N
                        + (N if b is not None else 0)) * itemsize)
    compiler_params = pltpu.CompilerParams(
        dimension_semantics=("parallel", "parallel", "arbitrary"),
        vmem_limit_bytes=_vmem_limit_bytes())

    x_spec = pl.BlockSpec((tm, tk), lambda i, j, k: (i, k))
    w_spec = pl.BlockSpec((tk, tn), lambda i, j, k: (k, j))
    o_spec = pl.BlockSpec((tm, tn), lambda i, j, k: (i, j))
    scratch = [pltpu.VMEM((tm, tn), jnp.float32)]

    if b is None:
        return pl.pallas_call(
            _linear_kernel,
            out_shape=jax.ShapeDtypeStruct((M, N), x.dtype),
            grid_spec=pltpu.PrefetchScalarGridSpec(
                num_scalar_prefetch=0, grid=grid,
                in_specs=[x_spec, w_spec], out_specs=o_spec,
                scratch_shapes=scratch),
            compiler_params=compiler_params,
            cost_estimate=cost,
        )(x, w)

    b2 = b.reshape(1, N)
    b_spec = pl.BlockSpec((1, tn), lambda i, j, k: (0, j))
    return pl.pallas_call(
        _linear_bias_kernel,
        out_shape=jax.ShapeDtypeStruct((M, N), x.dtype),
        grid_spec=pltpu.PrefetchScalarGridSpec(
            num_scalar_prefetch=0, grid=grid,
            in_specs=[x_spec, w_spec, b_spec], out_specs=o_spec,
            scratch_shapes=scratch),
        compiler_params=compiler_params,
        cost_estimate=cost,
    )(x, w, b2)


# ---------------------------------------------------------------------------
# Fused QKV projection: x is read ONCE, Q/K/V come out as 3 separate arrays
# (no wrapper-level slicing of a (M, 3E) buffer -> no extra HBM copies).
# ---------------------------------------------------------------------------

def _qkv_proj_kernel(x_ref, wq_ref, wk_ref, wv_ref, q_ref, k_ref, v_ref,
                     accq, acck, accv):
    @pl.when(pl.program_id(2) == 0)
    def _():
        accq[...] = jnp.zeros_like(accq)
        acck[...] = jnp.zeros_like(acck)
        accv[...] = jnp.zeros_like(accv)

    x = x_ref[...]
    accq[...] += jnp.dot(x, wq_ref[...], preferred_element_type=jnp.float32)
    acck[...] += jnp.dot(x, wk_ref[...], preferred_element_type=jnp.float32)
    accv[...] += jnp.dot(x, wv_ref[...], preferred_element_type=jnp.float32)

    @pl.when(pl.program_id(2) == pl.num_programs(2) - 1)
    def _():
        q_ref[...] = accq[...].astype(q_ref.dtype)
        k_ref[...] = acck[...].astype(k_ref.dtype)
        v_ref[...] = accv[...].astype(v_ref.dtype)


def qkv_projection_pallas(x, wq, wk, wv):
    """Self-attention projections: returns (x@wq, x@wk, x@wv), x read once."""
    M, K = x.shape
    N = wq.shape[1]
    tm, tn, tk = _linear_tiles(M, K, N, x.dtype, n_out=3)
    grid = (M // tm, N // tn, K // tk)
    itemsize = jnp.dtype(x.dtype).itemsize

    x_spec = pl.BlockSpec((tm, tk), lambda i, j, k: (i, k))
    w_spec = pl.BlockSpec((tk, tn), lambda i, j, k: (k, j))
    o_spec = pl.BlockSpec((tm, tn), lambda i, j, k: (i, j))

    return pl.pallas_call(
        _qkv_proj_kernel,
        out_shape=(jax.ShapeDtypeStruct((M, N), x.dtype),) * 3,
        grid_spec=pltpu.PrefetchScalarGridSpec(
            num_scalar_prefetch=0, grid=grid,
            in_specs=[x_spec, w_spec, w_spec, w_spec],
            out_specs=[o_spec, o_spec, o_spec],
            scratch_shapes=[pltpu.VMEM((tm, tn), jnp.float32)] * 3),
        compiler_params=pltpu.CompilerParams(
            dimension_semantics=("parallel", "parallel", "arbitrary"),
            vmem_limit_bytes=_vmem_limit_bytes()),
        cost_estimate=pl.CostEstimate(
            flops=6 * M * N * K, transcendentals=0,
            bytes_accessed=(M * K + 3 * K * N + 3 * M * N) * itemsize),
    )(x, wq, wk, wv)


# ---------------------------------------------------------------------------
# Flash-style attention (all heads of one batch row per grid step)
# ---------------------------------------------------------------------------

def _flash_attn_kernel(q_ref, k_ref, v_ref, o_ref, m_sc, l_sc, acc_sc,
                       *, causal, tq, tk):
    ki = pl.program_id(2)

    @pl.when(ki == 0)
    def _init():
        m_sc[...] = jnp.full_like(m_sc, -jnp.inf)
        l_sc[...] = jnp.zeros_like(l_sc)
        acc_sc[...] = jnp.zeros_like(acc_sc)

    q_start = pl.program_id(1) * tq
    k_start = ki * tk

    def _step():
        q = q_ref[...]                    # (H, tq, h)  scale pre-folded in W_Q
        k = k_ref[...]                    # (H, tk, h)  native dtype -> MXU
        v = v_ref[...]                    # (H, tk, h)

        s = jnp.einsum("hqd,hkd->hqk", q, k,
                       preferred_element_type=jnp.float32)       # (H, tq, tk)
        if causal:
            row = jax.lax.broadcasted_iota(jnp.int32, (tq, tk), 0) + q_start
            col = jax.lax.broadcasted_iota(jnp.int32, (tq, tk), 1) + k_start
            s = jnp.where((col > row)[None, :, :], -jnp.inf, s)

        m_prev = m_sc[...]
        m_new = jnp.maximum(m_prev, jnp.max(s, axis=-1, keepdims=True))
        alpha = jnp.exp(m_prev - m_new)
        p = jnp.exp(s - m_new)
        l_sc[...] = alpha * l_sc[...] + jnp.sum(p, axis=-1, keepdims=True)
        acc_sc[...] = alpha * acc_sc[...] + jnp.einsum(
            "hqk,hkd->hqd", p.astype(v.dtype), v,
            preferred_element_type=jnp.float32)
        m_sc[...] = m_new

    if causal:
        # Tiles entirely above the diagonal: skip compute (DMA already skipped
        # via the clamped K/V index_map).
        pl.when(k_start <= q_start + (tq - 1))(_step)
    else:
        _step()

    @pl.when(ki == pl.num_programs(2) - 1)
    def _finalize():
        inv = pl.reciprocal(l_sc[...], approx=True)     # EUP slot, ~free
        out = acc_sc[...] * inv                         # (H, tq, h) f32
        H = out.shape[0]
        # Build the concatenated (tq, H*h) slab in VMEM and do ONE lane-dense
        # store (no per-head width-h masked partial stores).
        slab = jnp.concatenate([out[hd] for hd in range(H)], axis=-1)
        o_ref[...] = slab.astype(o_ref.dtype)


def flash_attention_pallas(Q, K, V, causal):
    """Q:(B,H,Sq,h), K/V:(B,H,Sk,h) -> (B,Sq,H*h) already in concat layout."""
    B, H, Sq, h = Q.shape
    Sk = K.shape[2]
    E = H * h
    tq, tk = _attn_tiles(Sq, Sk, H, h, Q.dtype)
    n_q, n_k = Sq // tq, Sk // tk

    if causal:
        # Clamp the kv block index at the diagonal tile so above-diagonal K/V
        # tiles are never DMA'd (Pallas sees an unchanged block index).
        def kv_block(qi, ki):
            return jnp.minimum(ki, (qi * tq + tq - 1) // tk)
    else:
        def kv_block(qi, ki):
            return ki

    q_spec = pl.BlockSpec((None, H, tq, h), lambda b, qi, ki: (b, 0, qi, 0))
    k_spec = pl.BlockSpec((None, H, tk, h),
                          lambda b, qi, ki: (b, 0, kv_block(qi, ki), 0))
    v_spec = pl.BlockSpec((None, H, tk, h),
                          lambda b, qi, ki: (b, 0, kv_block(qi, ki), 0))
    o_spec = pl.BlockSpec((None, tq, E), lambda b, qi, ki: (b, qi, 0))

    itemsize = jnp.dtype(Q.dtype).itemsize
    denom = 2 if causal else 1
    cost = pl.CostEstimate(
        flops=4 * B * H * Sq * Sk * h // denom,
        transcendentals=B * H * Sq * Sk // denom,
        bytes_accessed=(Q.size + K.size + V.size + B * Sq * E) * itemsize)

    kernel = functools.partial(_flash_attn_kernel, causal=causal, tq=tq, tk=tk)
    return pl.pallas_call(
        kernel,
        out_shape=jax.ShapeDtypeStruct((B, Sq, E), Q.dtype),
        grid_spec=pltpu.PrefetchScalarGridSpec(
            num_scalar_prefetch=0,
            grid=(B, n_q, n_k),
            in_specs=[q_spec, k_spec, v_spec],
            out_specs=o_spec,
            scratch_shapes=[
                pltpu.VMEM((H, tq, 1), jnp.float32),   # running max m
                pltpu.VMEM((H, tq, 1), jnp.float32),   # running sum l
                pltpu.VMEM((H, tq, h), jnp.float32),   # output accumulator
            ]),
        compiler_params=pltpu.CompilerParams(
            dimension_semantics=("parallel", "parallel", "arbitrary"),
            vmem_limit_bytes=_vmem_limit_bytes()),
        cost_estimate=cost,
    )(Q, K, V)


# ---------------------------------------------------------------------------
# Module wrapper
# ---------------------------------------------------------------------------

class MultiHeadedAttentionPallas:
    def __init__(self, embedding_dim: int, num_heads: int, mask: bool = False,
                 key: jax.Array = None):
        self.embedding_dim = embedding_dim
        self.num_heads = num_heads
        self.h = embedding_dim // num_heads
        self.mask = mask

        if key is None:
            key = jax.random.PRNGKey(42)
        kq, kk, kv, kf, kb = jax.random.split(key, 5)
        bound = 1.0 / math.sqrt(embedding_dim)     # nn.Linear default scale
        shape = (embedding_dim, embedding_dim)     # stored as (in, out)
        self.W_Q = jax.random.uniform(kq, shape, jnp.float32, -bound, bound)
        self.W_K = jax.random.uniform(kk, shape, jnp.float32, -bound, bound)
        self.W_V = jax.random.uniform(kv, shape, jnp.float32, -bound, bound)
        self.W_ffn = jax.random.uniform(kf, shape, jnp.float32, -bound, bound)
        self.b_ffn = jax.random.uniform(kb, (embedding_dim,), jnp.float32,
                                        -bound, bound)
        # Fold the 1/sqrt(h) softmax scale into the Q projection weights so the
        # attention kernel never rescales its resident q tile per kv step.
        self._W_Q_scaled = self.W_Q * (1.0 / math.sqrt(self.h))

    def __call__(self, query, key, value):
        B, Sq, E = query.shape
        _, Sk, _ = key.shape
        H, h = self.num_heads, self.h

        if query is key and key is value:
            # Self-attention: one fused projection call (x read once), three
            # separate outputs -> no wrapper-level slicing / HBM copies.
            Qp, Kp, Vp = qkv_projection_pallas(
                query.reshape(B * Sq, E), self._W_Q_scaled, self.W_K, self.W_V)
        else:
            Qp = linear_pallas(query.reshape(B * Sq, E), self._W_Q_scaled)
            Kp = linear_pallas(key.reshape(B * Sk, E), self.W_K)
            Vp = linear_pallas(value.reshape(B * Sk, E), self.W_V)

        # Exact semantics of torch `.view(B, H, S, h)` (row-major reinterpret).
        Q = Qp.reshape(B, H, Sq, h)
        K = Kp.reshape(B, H, Sk, h)
        V = Vp.reshape(B, H, Sk, h)

        # Flash attention; output already in concatenated (B, Sq, E) layout,
        # written as one lane-dense slab per q tile.
        concat = flash_attention_pallas(Q, K, V, causal=self.mask)

        # TODO(synk): fuse the ffn matmul + bias into the attention finalize
        # (or alias `concat` into the ffn call) to save one HBM round trip.
        out = linear_pallas(concat.reshape(B * Sq, E), self.W_ffn, self.b_ffn)
        return out.reshape(B, Sq, E)


# ---------------------------------------------------------------------------
# Pure-JAX reference (mirrors the PyTorch forward) for a sanity check.
# ---------------------------------------------------------------------------

def reference_forward(mod: MultiHeadedAttentionPallas, query, key, value):
    B, Sq, E = query.shape
    _, Sk, _ = key.shape
    H, h = mod.num_heads, mod.h
    Q = (query.reshape(B * Sq, E) @ mod.W_Q).reshape(B, H, Sq, h)
    K = (key.reshape(B * Sk, E) @ mod.W_K).reshape(B, H, Sk, h)
    V = (value.reshape(B * Sk, E) @ mod.W_V).reshape(B, H, Sk, h)
    scores = jnp.einsum("bhqd,bhkd->bhqk", Q, K) / math.sqrt(h)
    if mod.mask:
        row = jnp.arange(Sq)[:, None]
        col = jnp.arange(Sk)[None, :]
        scores = jnp.where(col > row, -jnp.inf, scores)
    w = jax.nn.softmax(scores, axis=-1)
    ho = jnp.einsum("bhqk,bhkd->bhqd", w, V)                 # (B, H, Sq, h)
    concat = jnp.transpose(ho, (0, 2, 1, 3)).reshape(B, Sq, E)
    return (concat.reshape(B * Sq, E) @ mod.W_ffn + mod.b_ffn).reshape(B, Sq, E)


if __name__ == "__main__":
    B, S, E, H = 2, 8, 32, 4
    root = jax.random.PRNGKey(0)
    kq, kk, kv_, kw = jax.random.split(root, 4)
    query = jax.random.normal(kq, (B, S, E), jnp.float32)
    key = jax.random.normal(kk, (B, S, E), jnp.float32)
    value = jax.random.normal(kv_, (B, S, E), jnp.float32)

    # 1) Cross-attention, no causal mask (three separate projection kernels).
    mod = MultiHeadedAttentionPallas(embedding_dim=E, num_heads=H, mask=False,
                                     key=kw)
    out = jax.block_until_ready(mod(query, key, value))
    ref = reference_forward(mod, query, key, value)
    assert out.shape == (B, S, E)
    assert jnp.allclose(out, ref, atol=1e-2, rtol=1e-2), "mismatch (non-causal)"

    # 2) Causal self-attention (fused QKV kernel + causal K/V DMA/compute skip).
    mod_c = MultiHeadedAttentionPallas(embedding_dim=E, num_heads=H, mask=True,
                                       key=kw)
    out_c = jax.block_until_ready(mod_c(query, query, query))
    ref_c = reference_forward(mod_c, query, query, query)
    assert jnp.allclose(out_c, ref_c, atol=1e-2, rtol=1e-2), "mismatch (causal)"

    print("KERNEL_OK")
</pallas_src>

<mosaic_0001>
module attributes {stable_mosaic.version = 11 : i64} {
  func.func @_linear_kernel(%arg0: i32, %arg1: i32, %arg2: i32, %arg3: memref<16x32xf32, #tpu.memory_space<vmem>>, %arg4: memref<32x32xf32, #tpu.memory_space<vmem>>, %arg5: memref<16x32xf32, #tpu.memory_space<vmem>>, %arg6: memref<16x32xf32, #tpu.memory_space<vmem>>) attributes {dimension_semantics = [#tpu.dimension_semantics<parallel>, #tpu.dimension_semantics<parallel>, #tpu.dimension_semantics<arbitrary>], iteration_bounds = array<i64: 1, 1, 1>, scalar_prefetch = 0 : i64, scratch_operands = 1 : i64, tpu.core_type = #tpu.core_type<tc>, window_params = [{transform_indices = @transform_0, window_bounds = array<i64: 16, 32>}, {transform_indices = @transform_1, window_bounds = array<i64: 32, 32>}, {transform_indices = @transform_2, window_bounds = array<i64: 16, 32>}]} {
    %c0_i32 = arith.constant 0 : i32
    %0 = arith.cmpi eq, %arg2, %c0_i32 : i32
    %1 = arith.extui %0 : i1 to i32
    %c0_i32_0 = arith.constant 0 : i32
    %2 = arith.cmpi ne, %1, %c0_i32_0 : i32
    scf.if %2 {
      %cst_10 = arith.constant 0.000000e+00 : f32
      %12 = vector.broadcast %cst_10 : f32 to vector<16x32xf32>
      %c0_11 = arith.constant 0 : index
      %c0_12 = arith.constant 0 : index
      %13 = vector.load %arg6[%c0_11, %c0_12] : memref<16x32xf32, #tpu.memory_space<vmem>>, vector<16x32xf32>
      tpu.vector_store %arg6[%c0_11, %c0_12], %12 {strides = array<i32>} : memref<16x32xf32, #tpu.memory_space<vmem>>, vector<16x32xf32>,
    } else {
    }
    %c0 = arith.constant 0 : index
    %c0_1 = arith.constant 0 : index
    %3 = vector.load %arg6[%c0, %c0_1] : memref<16x32xf32, #tpu.memory_space<vmem>>, vector<16x32xf32>
    %c0_2 = arith.constant 0 : index
    %c0_3 = arith.constant 0 : index
    %4 = vector.load %arg3[%c0_2, %c0_3] : memref<16x32xf32, #tpu.memory_space<vmem>>, vector<16x32xf32>
    %c0_4 = arith.constant 0 : index
    %c0_5 = arith.constant 0 : index
    %5 = vector.load %arg4[%c0_4, %c0_5] : memref<32x32xf32, #tpu.memory_space<vmem>>, vector<32x32xf32>
    %cst = arith.constant dense<0.000000e+00> : vector<16x32xf32>
    %6 = tpu.matmul %4, %5, %cst {dimension_numbers = #tpu.dot_dimension_numbers<[1], [0], [0], [1], [0, 0, 1, 1], [], []>} : vector<16x32xf32>, vector<32x32xf32>, vector<16x32xf32> -> vector<16x32xf32>
    %7 = arith.addf %3, %6 : vector<16x32xf32>
    %c0_6 = arith.constant 0 : index
    %c0_7 = arith.constant 0 : index
    %8 = vector.load %arg6[%c0_6, %c0_7] : memref<16x32xf32, #tpu.memory_space<vmem>>, vector<16x32xf32>
    tpu.vector_store %arg6[%c0_6, %c0_7], %7 {strides = array<i32>} : memref<16x32xf32, #tpu.memory_space<vmem>>, vector<16x32xf32>,
    %c0_i32_8 = arith.constant 0 : i32
    %9 = arith.cmpi eq, %arg2, %c0_i32_8 : i32
    %10 = arith.extui %9 : i1 to i32
    %c0_i32_9 = arith.constant 0 : i32
    %11 = arith.cmpi ne, %10, %c0_i32_9 : i32
    scf.if %11 {
      %c0_10 = arith.constant 0 : index
      %c0_11 = arith.constant 0 : index
      %12 = vector.load %arg6[%c0_10, %c0_11] : memref<16x32xf32, #tpu.memory_space<vmem>>, vector<16x32xf32>
      %c0_12 = arith.constant 0 : index
      %c0_13 = arith.constant 0 : index
      %13 = vector.load %arg5[%c0_12, %c0_13] : memref<16x32xf32, #tpu.memory_space<vmem>>, vector<16x32xf32>
      tpu.vector_store %arg5[%c0_12, %c0_13], %12 {strides = array<i32>} : memref<16x32xf32, #tpu.memory_space<vmem>>, vector<16x32xf32>,
    } else {
    }
    return
  }
  func.func @transform_0(%arg0: i32, %arg1: i32, %arg2: i32) -> (i32, i32) {
    %c0_i32 = arith.constant 0 : i32
    return %arg0, %arg2 : i32, i32
  }
  func.func @transform_1(%arg0: i32, %arg1: i32, %arg2: i32) -> (i32, i32) {
    %c0_i32 = arith.constant 0 : i32
    return %arg2, %arg1 : i32, i32
  }
  func.func @transform_2(%arg0: i32, %arg1: i32, %arg2: i32) -> (i32, i32) {
    %c0_i32 = arith.constant 0 : i32
    return %arg0, %arg1 : i32, i32
  }
}

</mosaic_0001>

<llo_original>
// kernel: tpu_custom_call.1
$region0: #{tpu_custom_call.1}
  #allocation0 [shape = 'u32[]', space=smem, size = 0x4, offset = 0x4, fixed_abs, tag = 'smem constant byte address 0x4 - core index']
  #allocation1 [shape = 'u32[72,128]{1,0:T(1,128)}', space=vmem, size = 0x9000, scoped, tag = 'internal scratch']
  #allocation2 [shape = 'f32[16,32]{1,0:T(8,128)}', space=vmem, size = 0x2000, scoped, tag = 'scratch operand']
  %s0 = inlined_call_operand.hbm [shape: f32[16,32], index: 0, kind: input, shape index: {}]
  %s1 = inlined_call_operand.hbm [shape: f32[32,32], index: 1, kind: input, shape index: {}]
  %s2 = inlined_call_operand.hbm [shape: f32[16,32], index: 2, kind: output, shape index: {}]
  %s3 = sld [smem:[#allocation0]]
  $region34: #{tpu_custom_call.1} parent=0
    _
  %s5 = ssub.s32 1, %s3
  %s6 = scalar_select 0, %s5, %s3
  $region1: #{tpu_custom_call.1} parent=0
    #allocation3 [shape = 'u8[8192]{0}', space=vmem, size = 0x2000, scoped, tag = 'input window, operand 0, single buffered']
    #allocation4 [shape = 's32[1]{0}', space=sflag, size = 0x4, scoped, tag = 'scoped memory for tpu_custom_call.1']
    #allocation5 [shape = 's32[1]{0}', space=sflag, size = 0x4, scoped, tag = 'scoped memory for tpu_custom_call.1']
    #allocation6 [shape = 'u8[16384]{0}', space=vmem, size = 0x4000, scoped, tag = 'input window, operand 1, single buffered']
    #allocation7 [shape = 's32[1]{0}', space=sflag, size = 0x4, scoped, tag = 'scoped memory for tpu_custom_call.1']
    #allocation8 [shape = 'u8[8192]{0}', space=vmem, size = 0x2000, scoped, tag = 'output window, operand 0, single buffered']
    %7 = vsyncpa [#allocation4], 0
    %8 = vsyncpa [#allocation7], 0
    %9 = vsyncpa [#allocation5], 0
    // Predicated region
    $region2: #{tpu_custom_call.1} parent=1 // pred_check
      _
    $region3: #{tpu_custom_call.1} parent=1 // pred_check_branch
      %11 = sbr.rel (0) target = $region5
    $region4: #{tpu_custom_call.1} parent=1 // pred_region
      %13 = vsyncadd [#allocation4], 0
      %s14 = sshll.u32 %s0, 4
      %s15 = int_to_ptr.hbm [resolvable:$true] %s14
      %s16 = sshll.u32 [#allocation3], 4
      %s17 = int_to_ptr.vmem [resolvable:$true] %s16
      %22 = dma.hbm_to_vmem [thread:$0]  %s15, 256, %s17, [#allocation4], 128, 128, 8
    $region5: #{tpu_custom_call.1} parent=1 // pred_fallthru
      _
    // Predicated region
    $region6: #{tpu_custom_call.1} parent=1 // pred_check
      _
    $region7: #{tpu_custom_call.1} parent=1 // pred_check_branch
      %24 = sbr.rel (0) target = $region9
    $region8: #{tpu_custom_call.1} parent=1 // pred_region
      %26 = vsyncadd [#allocation7], 0
      %s27 = sshll.u32 %s1, 4
      %s28 = int_to_ptr.hbm [resolvable:$true] %s27
      %s29 = sshll.u32 [#allocation6], 4
      %s30 = int_to_ptr.vmem [resolvable:$true] %s29
      %35 = dma.hbm_to_vmem [thread:$0]  %s28, 512, %s30, [#allocation7], 128, 128, 8
    $region9: #{tpu_custom_call.1} parent=1 // pred_fallthru
      _
    // Predicated region
    $region10: #{tpu_custom_call.1} parent=1 // pred_check
      _
    $region11: #{tpu_custom_call.1} parent=1 // pred_check_branch
      %37 = sbr.rel (0) target = $region13
    $region12: #{tpu_custom_call.1} parent=1 // pred_region
      %39 = dma.done [#allocation4], 256
    $region13: #{tpu_custom_call.1} parent=1 // pred_fallthru
      _
    // Predicated region
    $region14: #{tpu_custom_call.1} parent=1 // pred_check
      _
    $region15: #{tpu_custom_call.1} parent=1 // pred_check_branch
      %41 = sbr.rel (0) target = $region17
    $region16: #{tpu_custom_call.1} parent=1 // pred_region
      %43 = dma.done [#allocation7], 512
    $region17: #{tpu_custom_call.1} parent=1 // pred_fallthru
      _
    %p44 = scmp.eq.s32.totalorder 0, 0
    // Predicated region
    $region18: #{tpu_custom_call.1} parent=1 // pred_check
      %p45 = pneg %p44
    $region19: #{tpu_custom_call.1} parent=1 // pred_check_branch
      %47 = sbr.rel (%p45) target = $region21
    $region20: #{tpu_custom_call.1} parent=1 // pred_region
      %vm48 = vcmask 261120
      %49 = vst.msk [vmem:[#allocation2] sm:$0xff] %vm48, 0.0
      %50 = vst.msk [vmem:[#allocation2 + $0x8] sm:$0xff] %vm48, 0.0
    $region21: #{tpu_custom_call.1} parent=1 // pred_fallthru
      _
    %v51 = vld [vmem:[#allocation2] sm:$0xff]
    %v52 = vld [vmem:[#allocation2 + $0x8] sm:$0xff]
    %v53 = vld [vmem:[#allocation3] sm:$0xff]
    %v54 = vld [vmem:[#allocation3 + $0x8] sm:$0xff]
    %v55 = vld [vmem:[#allocation6] sm:$0xff]
    %v56 = vld [vmem:[#allocation6 + $0x8] sm:$0xff]
    %v57 = vld [vmem:[#allocation6 + $0x10] sm:$0xff]
    %v58 = vld [vmem:[#allocation6 + $0x18] sm:$0xff]
    %vm59 = vcmask 261120
    %v61 = vsel %vm59, %v53, 0
    %v64 = vsel %vm59, %v54, 0
    %66 = vmatpush.msra.mxu0 0.0
    %67 = vmatpush.msra.mxu0 0.0
    %68 = vmatpush.msra.mxu0 0.0
    %69 = vmatpush.msra.mxu0 0.0
    %70 = vmatpush.msra.mxu0 0.0
    %71 = vmatpush.msra.mxu0 0.0
    %72 = vmatpush.msra.mxu0 0.0
    %73 = vmatpush.msra.mxu0 0.0
    %74 = vmatpush.msra.mxu0 0.0
    %75 = vmatpush.msra.mxu0 0.0
    %76 = vmatpush.msra.mxu0 0.0
    %77 = vmatpush.msra.mxu0 0.0
    %78 = vmatpush.msra.mxu0 %v58
    %79 = vmatpush.msra.mxu0 %v57
    %80 = vmatpush.msra.mxu0 %v56
    %81 = vmatpush.msra.mxu0 %v55
    %82 = vmatmul.f32.gmra.mxu0 %v61
    %v83 = vpop.f32.mrf.mxu0
    %v84 = vadd.f32 0.0, %v83
    %85 = vmatmul.f32.gmra.mxu0 %v64
    %v86 = vpop.f32.mrf.mxu0
    %v87 = vadd.f32 0.0, %v86
    %88 = vdwg.mxu0
    %v89 = vadd.f32 %v51, %v84
    %v90 = vadd.f32 %v52, %v87
    %91 = vst.msk [vmem:[#allocation2] sm:$0xff] %vm59, %v89
    %92 = vst.msk [vmem:[#allocation2 + $0x8] sm:$0xff] %vm59, %v90
    // Predicated region
    $region22: #{tpu_custom_call.1} parent=1 // pred_check
      %p93 = pneg %p44
    $region23: #{tpu_custom_call.1} parent=1 // pred_check_branch
      %95 = sbr.rel (%p93) target = $region25
    $region24: #{tpu_custom_call.1} parent=1 // pred_region
      %v96 = vld [vmem:[#allocation2] sm:$0xff]
      %v97 = vld [vmem:[#allocation2 + $0x8] sm:$0xff]
      %98 = vst.msk [vmem:[#allocation8] sm:$0xff] %vm59, %v96
      %99 = vst.msk [vmem:[#allocation8 + $0x8] sm:$0xff] %vm59, %v97
    $region25: #{tpu_custom_call.1} parent=1 // pred_fallthru
      _
    // Predicated region
    $region26: #{tpu_custom_call.1} parent=1 // pred_check
      _
    $region27: #{tpu_custom_call.1} parent=1 // pred_check_branch
      %101 = sbr.rel (0) target = $region29
    $region28: #{tpu_custom_call.1} parent=1 // pred_region
      %103 = vsyncadd [#allocation5], 0
      %s104 = sshll.u32 [#allocation8], 4
      %s105 = int_to_ptr.vmem [resolvable:$true] %s104
      %s106 = sshll.u32 %s2, 4
      %s107 = int_to_ptr.hbm [resolvable:$true] %s106
      %112 = dma.vmem_to_hbm [thread:$0]  %s105, 256, %s107, [#allocation5], 128, 128, 8
    $region29: #{tpu_custom_call.1} parent=1 // pred_fallthru
      _
    // Predicated region
    $region30: #{tpu_custom_call.1} parent=1 // pred_check
      _
    $region31: #{tpu_custom_call.1} parent=1 // pred_check_branch
      %114 = sbr.rel (0) target = $region33
    $region32: #{tpu_custom_call.1} parent=1 // pred_region
      %116 = dma.done [#allocation5], 256
    $region33: #{tpu_custom_call.1} parent=1 // pred_fallthru
      _
    %117 = vsyncpa [#allocation4], 1
    %118 = vsyncpa [#allocation7], 1
    %119 = vsyncpa [#allocation5], 1

</llo_original>
